<compile_context>
chip_gen: v7x
topology: tpu7x:2x2x1
jax: 0.10.0
libtpu: 0.0.40
codegen_flags: <defaults>
</compile_context>

<pallas_src>
import functools

import jax
import jax.numpy as jnp
from jax import lax
from jax.experimental import pallas as pl
from jax.experimental.pallas import tpu as pltpu

_BIG = 1e30          # sentinel squared-norm for padded points (cannot win a min)
_M_STRIP = 128       # gts rows per inner sub-matmul
_N_BLOCK = 256       # pred columns per inner sub-matmul (full MXU width on v6e/v7x)


def _round_up(x, m):
    return (x + m - 1) // m * m


def _cdiv(a, b):
    return -(-a // b)


def _split_bf16(a):
    """f32 -> (hi, lo) bf16 pair with hi + lo ≈ a (compensated split)."""
    hi = a.astype(jnp.bfloat16)
    lo = (a - hi.astype(jnp.float32)).astype(jnp.bfloat16)
    return hi, lo


def _augmented_gts(x, n_pad, k_pad):
    """(B, N, D) f32 -> (B, n_pad, k_pad) bf16 rows [Xhi | Xlo | Xhi], X=[-2x, ||x||^2, 1]."""
    b, n, _ = x.shape
    xp = jnp.pad(x, ((0, 0), (0, n_pad - n), (0, 0)))
    norms = jnp.sum(xp * xp, axis=-1, keepdims=True)               # (B, n_pad, 1)
    valid = (jnp.arange(n_pad) < n)[None, :, None]
    norms = jnp.where(valid, norms, _BIG)
    ones = jnp.ones((b, n_pad, 1), jnp.float32)
    base = jnp.concatenate([-2.0 * xp, norms, ones], axis=-1)      # (B, n_pad, K)
    hi, lo = _split_bf16(base)
    out = jnp.concatenate([hi, lo, hi], axis=-1)                   # (B, n_pad, 3K)
    pad = k_pad - out.shape[-1]
    if pad:
        out = jnp.pad(out, ((0, 0), (0, 0), (0, pad)))
    return out


def _augmented_preds(y, n_pad, k_pad):
    """(B, N, D) f32 -> (B, k_pad, n_pad) bf16 cols [Yhi ; Yhi ; Ylo], Y=[y; 1; ||y||^2] (lane-major)."""
    b, n, _ = y.shape
    yp = jnp.pad(y, ((0, 0), (0, n_pad - n), (0, 0)))
    norms = jnp.sum(yp * yp, axis=-1)                              # (B, n_pad)
    valid = (jnp.arange(n_pad) < n)[None, :]
    norms = jnp.where(valid, norms, _BIG)
    ones = jnp.ones((b, n_pad), jnp.float32)
    base = jnp.concatenate(
        [jnp.swapaxes(yp, 1, 2), ones[:, None, :], norms[:, None, :]], axis=1
    )                                                              # (B, K, n_pad)
    hi, lo = _split_bf16(base)
    out = jnp.concatenate([hi, hi, lo], axis=1)                    # (B, 3K, n_pad)
    pad = k_pad - out.shape[1]
    if pad:
        out = jnp.pad(out, ((0, 0), (0, pad), (0, 0)))
    return out


def chamfer_kernel(xa_ref, ya_ref, mini_ref, minj_ref, acc_ref):
    # xa_ref  : (1, NG_CHUNK, K3) bf16   gts chunk, resident across the j axis
    # ya_ref  : (1, K3, TN)       bf16   preds tile (points on lanes)
    # mini_ref: (1, 1, 1, TN)     f32    min over this chunk's gts, per pred col
    # minj_ref: (1, NG_CHUNK, 1)  f32    min over all preds, per gts row (last j)
    # acc_ref : VMEM (NG_CHUNK, 128) f32 running 128-lane-folded row minimum
    jt = pl.program_id(2)
    ng_chunk = xa_ref.shape[1]
    tn = ya_ref.shape[2]

    @pl.when(jt == 0)
    def _():
        acc_ref[...] = jnp.full(acc_ref.shape, jnp.inf, acc_ref.dtype)

    m_strips = [(m0, min(_M_STRIP, ng_chunk - m0)) for m0 in range(0, ng_chunk, _M_STRIP)]
    c_blocks = [(c0, min(_N_BLOCK, tn - c0)) for c0 in range(0, tn, _N_BLOCK)]

    col_mins = [None] * len(c_blocks)
    for m0, ms in m_strips:
        xa_m = xa_ref[0, pl.ds(m0, ms), :]                 # (ms, K3) bf16
        row_min = acc_ref[pl.ds(m0, ms), :]                # (ms, 128) f32 running min
        for ci, (c0, cs) in enumerate(c_blocks):
            ya_c = ya_ref[0, :, pl.ds(c0, cs)]             # (K3, cs) bf16
            # P strip straight off the MXU (single bf16 pass; f32 accumulate).
            p = lax.dot_general(
                xa_m, ya_c, (((1,), (0,)), ((), ())),
                preferred_element_type=jnp.float32,
            )                                              # (ms, cs) f32
            # loss_1 direction: min over gts rows of this strip/block.
            cm = jnp.min(p, axis=0, keepdims=True)         # (1, cs)
            col_mins[ci] = cm if col_mins[ci] is None else jnp.minimum(col_mins[ci], cm)
            # loss_2 direction: fold cs pred columns into 128 lanes (pure VPU mins).
            fold = p[:, 0:128]
            for h in range(128, cs, 128):
                fold = jnp.minimum(fold, p[:, h:h + 128])
            row_min = jnp.minimum(row_min, fold)
        acc_ref[pl.ds(m0, ms), :] = row_min

    # Lane-dense per-pred-column mins for this (b, g, j) step.
    mini_ref[0, 0] = jnp.concatenate(col_mins, axis=1)     # (1, TN)

    @pl.when(jt == pl.num_programs(2) - 1)
    def _():
        # Single cross-lane reduce per (b, g) chunk, deferred to the last j tile.
        minj_ref[0] = jnp.min(acc_ref[...], axis=1, keepdims=True)   # (NG_CHUNK, 1)


@functools.partial(jax.jit, static_argnames=("tile_n", "chunk_g"))
def chamfer_loss(preds, gts, *, tile_n=1024, chunk_g=512):
    """Pallas equivalent of ChamferLoss.forward(preds, gts) -> scalar."""
    b, ng, d = gts.shape
    bp, np_, dp = preds.shape
    assert b == bp and d == dp

    x = gts.astype(jnp.float32)
    y = preds.astype(jnp.float32)

    k3 = _round_up(3 * (d + 2), 8)                 # hi/lo-expanded contraction width

    # gts chunking (parallel grid axis + bounded per-step footprint).
    ngp = _round_up(max(ng, 16), 16)
    n_chunks = _cdiv(ngp, chunk_g)
    ng_chunk = _round_up(_cdiv(ngp, n_chunks), 16)
    ng_pad = n_chunks * ng_chunk

    # preds tiling: pad to 128 first, then split as evenly as possible.
    npp = _round_up(max(np_, 128), 128)
    nj = _cdiv(npp, tile_n)
    tn = _round_up(_cdiv(npp, nj), 128)
    np_pad = nj * tn

    xa = _augmented_gts(x, ng_pad, k3)             # (B, NG_PAD, K3) bf16
    ya = _augmented_preds(y, np_pad, k3)           # (B, K3, NP_PAD) bf16

    mini, minj = pl.pallas_call(
        chamfer_kernel,
        out_shape=(
            jax.ShapeDtypeStruct((b, n_chunks, 1, np_pad), jnp.float32),  # per-chunk col mins
            jax.ShapeDtypeStruct((b, ng_pad, 1), jnp.float32),            # per-gts-row mins
        ),
        grid_spec=pltpu.PrefetchScalarGridSpec(
            num_scalar_prefetch=0,
            grid=(b, n_chunks, nj),
            in_specs=[
                pl.BlockSpec((1, ng_chunk, k3), lambda bi, g, j: (bi, g, 0)),
                pl.BlockSpec((1, k3, tn), lambda bi, g, j: (bi, 0, j)),
            ],
            out_specs=[
                pl.BlockSpec((1, 1, 1, tn), lambda bi, g, j: (bi, g, 0, j)),
                pl.BlockSpec((1, ng_chunk, 1), lambda bi, g, j: (bi, g, 0)),
            ],
            scratch_shapes=[pltpu.VMEM((ng_chunk, 128), jnp.float32)],
        ),
        compiler_params=pltpu.CompilerParams(
            dimension_semantics=("parallel", "parallel", "arbitrary"),
            vmem_limit_bytes=32 * 1024 * 1024,
        ),
    )(xa, ya)

    # Combine the per-chunk partial mins (over g) in XLA, drop padding, clamp, sum.
    mins_per_pred = jnp.min(mini[:, :, 0, :np_], axis=1)        # (B, Np)
    loss_1 = jnp.sum(jnp.maximum(mins_per_pred, 0.0))           # sum_j min_i P[i, j]
    loss_2 = jnp.sum(jnp.maximum(minj[:, :ng, 0], 0.0))         # sum_i min_j P[i, j]
    return loss_1 + loss_2


def chamfer_loss_ref(preds, gts):
    """Pure-JAX reference mirroring the PyTorch module (direct-difference form)."""
    x = gts.astype(jnp.float32)
    y = preds.astype(jnp.float32)
    diff = x[:, :, None, :] - y[:, None, :, :]
    p = jnp.sum(diff * diff, axis=-1)            # (B, Ng, Np)
    loss_1 = jnp.sum(jnp.min(p, axis=1))
    loss_2 = jnp.sum(jnp.min(p, axis=2))
    return loss_1 + loss_2


if __name__ == "__main__":
    key = jax.random.PRNGKey(0)
    k1, k2 = jax.random.split(key)

    B, Ng, Np, D = 2, 128, 64, 3
    gts = jax.random.normal(k1, (B, Ng, D), dtype=jnp.float32)
    preds = jax.random.normal(k2, (B, Np, D), dtype=jnp.float32)

    out = chamfer_loss(preds, gts)
    jax.block_until_ready(out)

    ref = chamfer_loss_ref(preds, gts)
    assert jnp.allclose(out, ref, rtol=2e-3, atol=2e-3), (out, ref)

    print("KERNEL_OK")
</pallas_src>

<mosaic_0001>
module attributes {stable_mosaic.version = 11 : i64} {
  func.func @chamfer_kernel(%arg0: i32, %arg1: i32, %arg2: i32, %arg3: memref<1x128x16xbf16, #tpu.memory_space<vmem>>, %arg4: memref<1x16x128xbf16, #tpu.memory_space<vmem>>, %arg5: memref<1x1x1x128xf32, #tpu.memory_space<vmem>>, %arg6: memref<1x128x1xf32, #tpu.memory_space<vmem>>, %arg7: memref<128x128xf32, #tpu.memory_space<vmem>>) attributes {dimension_semantics = [#tpu.dimension_semantics<parallel>, #tpu.dimension_semantics<parallel>, #tpu.dimension_semantics<arbitrary>], iteration_bounds = array<i64: 2, 1, 1>, scalar_prefetch = 0 : i64, scratch_operands = 1 : i64, tpu.core_type = #tpu.core_type<tc>, window_params = [{transform_indices = @transform_0, window_bounds = array<i64: 1, 128, 16>}, {transform_indices = @transform_1, window_bounds = array<i64: 1, 16, 128>}, {transform_indices = @transform_2, window_bounds = array<i64: 1, 1, 1, 128>}, {transform_indices = @transform_3, window_bounds = array<i64: 1, 128, 1>}]} {
    %c0_i32 = arith.constant 0 : i32
    %0 = arith.cmpi eq, %arg2, %c0_i32 : i32
    %1 = arith.extui %0 : i1 to i32
    %c0_i32_0 = arith.constant 0 : i32
    %2 = arith.cmpi ne, %1, %c0_i32_0 : i32
    scf.if %2 {
      %cst_17 = arith.constant 0x7F800000 : f32
      %19 = vector.broadcast %cst_17 : f32 to vector<128x128xf32>
      %c0_18 = arith.constant 0 : index
      %c0_19 = arith.constant 0 : index
      %20 = vector.load %arg7[%c0_18, %c0_19] : memref<128x128xf32, #tpu.memory_space<vmem>>, vector<128x128xf32>
      tpu.vector_store %arg7[%c0_18, %c0_19], %19 {strides = array<i32>} : memref<128x128xf32, #tpu.memory_space<vmem>>, vector<128x128xf32>,
    } else {
    }
    %c0 = arith.constant 0 : index
    %c0_1 = arith.constant 0 : index
    %c0_2 = arith.constant 0 : index
    %3 = vector.load %arg3[%c0, %c0_1, %c0_2] : memref<1x128x16xbf16, #tpu.memory_space<vmem>>, vector<1x128x16xbf16>
    %4 = vector.shape_cast %3 : vector<1x128x16xbf16> to vector<128x16xbf16>
    %c0_3 = arith.constant 0 : index
    %c0_4 = arith.constant 0 : index
    %5 = vector.load %arg7[%c0_3, %c0_4] : memref<128x128xf32, #tpu.memory_space<vmem>>, vector<128x128xf32>
    %c0_5 = arith.constant 0 : index
    %c0_6 = arith.constant 0 : index
    %c0_7 = arith.constant 0 : index
    %6 = vector.load %arg4[%c0_5, %c0_6, %c0_7] : memref<1x16x128xbf16, #tpu.memory_space<vmem>>, vector<1x16x128xbf16>
    %7 = vector.shape_cast %6 : vector<1x16x128xbf16> to vector<16x128xbf16>
    %cst = arith.constant dense<0.000000e+00> : vector<128x128xf32>
    %8 = tpu.matmul %4, %7, %cst {dimension_numbers = #tpu.dot_dimension_numbers<[1], [0], [0], [1], [0, 0, 1, 1], [], []>} : vector<128x16xbf16>, vector<16x128xbf16>, vector<128x128xf32> -> vector<128x128xf32>
    %cst_8 = arith.constant dense<0x7F800000> : vector<128xf32>
    %9 = vector.multi_reduction <minimumf>, %8, %cst_8 [0] : vector<128x128xf32> to vector<128xf32>
    %10 = vector.shape_cast %9 : vector<128xf32> to vector<1x128xf32>
    %11 = arith.minimumf %5, %8 : vector<128x128xf32>
    %c0_9 = arith.constant 0 : index
    %c0_10 = arith.constant 0 : index
    %12 = vector.load %arg7[%c0_9, %c0_10] : memref<128x128xf32, #tpu.memory_space<vmem>>, vector<128x128xf32>
    tpu.vector_store %arg7[%c0_9, %c0_10], %11 {strides = array<i32>} : memref<128x128xf32, #tpu.memory_space<vmem>>, vector<128x128xf32>,
    %c0_11 = arith.constant 0 : index
    %c0_12 = arith.constant 0 : index
    %c0_13 = arith.constant 0 : index
    %c0_14 = arith.constant 0 : index
    %13 = vector.load %arg5[%c0_11, %c0_12, %c0_13, %c0_14] : memref<1x1x1x128xf32, #tpu.memory_space<vmem>>, vector<1x1x1x128xf32>
    %14 = vector.shape_cast %13 : vector<1x1x1x128xf32> to vector<1x128xf32>
    %15 = vector.shape_cast %10 : vector<1x128xf32> to vector<1x1x1x128xf32>
    tpu.vector_store %arg5[%c0_11, %c0_12, %c0_13, %c0_14], %15 {strides = array<i32>} : memref<1x1x1x128xf32, #tpu.memory_space<vmem>>, vector<1x1x1x128xf32>,
    %c0_i32_15 = arith.constant 0 : i32
    %16 = arith.cmpi eq, %arg2, %c0_i32_15 : i32
    %17 = arith.extui %16 : i1 to i32
    %c0_i32_16 = arith.constant 0 : i32
    %18 = arith.cmpi ne, %17, %c0_i32_16 : i32
    scf.if %18 {
      %c0_17 = arith.constant 0 : index
      %c0_18 = arith.constant 0 : index
      %19 = vector.load %arg7[%c0_17, %c0_18] : memref<128x128xf32, #tpu.memory_space<vmem>>, vector<128x128xf32>
      %cst_19 = arith.constant dense<0x7F800000> : vector<128xf32>
      %20 = vector.multi_reduction <minimumf>, %19, %cst_19 [1] : vector<128x128xf32> to vector<128xf32>
      %21 = vector.shape_cast %20 : vector<128xf32> to vector<128x1xf32>
      %c0_20 = arith.constant 0 : index
      %c0_21 = arith.constant 0 : index
      %c0_22 = arith.constant 0 : index
      %22 = vector.load %arg6[%c0_20, %c0_21, %c0_22] : memref<1x128x1xf32, #tpu.memory_space<vmem>>, vector<1x128x1xf32>
      %23 = vector.shape_cast %22 : vector<1x128x1xf32> to vector<128x1xf32>
      %24 = vector.shape_cast %21 : vector<128x1xf32> to vector<1x128x1xf32>
      tpu.vector_store %arg6[%c0_20, %c0_21, %c0_22], %24 {strides = array<i32>} : memref<1x128x1xf32, #tpu.memory_space<vmem>>, vector<1x128x1xf32>,
    } else {
    }
    return
  }
  func.func @transform_0(%arg0: i32, %arg1: i32, %arg2: i32) -> (i32, i32, i32) {
    %c0_i32 = arith.constant 0 : i32
    %c0_i32_0 = arith.constant 0 : i32
    return %arg0, %arg1, %c0_i32 : i32, i32, i32
  }
  func.func @transform_1(%arg0: i32, %arg1: i32, %arg2: i32) -> (i32, i32, i32) {
    %c0_i32 = arith.constant 0 : i32
    %c0_i32_0 = arith.constant 0 : i32
    return %arg0, %c0_i32, %arg2 : i32, i32, i32
  }
  func.func @transform_2(%arg0: i32, %arg1: i32, %arg2: i32) -> (i32, i32, i32, i32) {
    %c0_i32 = arith.constant 0 : i32
    %c0_i32_0 = arith.constant 0 : i32
    return %arg0, %arg1, %c0_i32, %arg2 : i32, i32, i32, i32
  }
  func.func @transform_3(%arg0: i32, %arg1: i32, %arg2: i32) -> (i32, i32, i32) {
    %c0_i32 = arith.constant 0 : i32
    %c0_i32_0 = arith.constant 0 : i32
    return %arg0, %arg1, %c0_i32 : i32, i32, i32
  }
}

</mosaic_0001>

<llo_original>
// kernel: chamfer_loss.1
$region0: #{chamfer_loss.1}
  #allocation0 [shape = 'u32[]', space=smem, size = 0x4, offset = 0x4, fixed_abs, tag = 'smem constant byte address 0x4 - core index']
  #allocation1 [shape = 'u32[144,128]{1,0:T(1,128)}', space=vmem, size = 0x12000, scoped, tag = 'internal scratch']
  #allocation2 [shape = 'f32[128,128]{1,0:T(8,128)}', space=vmem, size = 0x10000, scoped, tag = 'scratch operand']
  %s0 = inlined_call_operand.vmem [shape: bf16[2,128,16], index: 0, kind: input, shape index: {}]
  %s1 = inlined_call_operand.vmem [shape: bf16[2,16,128], index: 1, kind: input, shape index: {}]
  %s2 = inlined_call_operand.vmem [shape: f32[2,1,1,128], index: 2, kind: output, shape index: {0}]
  %s3 = inlined_call_operand.vmem [shape: f32[2,128,1], index: 3, kind: output, shape index: {1}]
  %4 = xla_tuple %s2, %s3
  %s5 = sld [smem:[#allocation0]]
  $region57: #{chamfer_loss.1} parent=0
    _
  %s7 = ssub.s32 1, %s5
  %s8 = scalar_select 0, %s7, %s5
  loop: start=0, step=1, limit=4
  $region2: #{chamfer_loss.1} parent=0 // loop_pre_header
    _
  $region3: #{chamfer_loss.1} parent=0 // loop_header
    %s10 = sphi 0, %s14
    %p11 = scmp.ge.s32.totalorder %s10, 4
    %s17 = sphi 0, %s36
    %s18 = sphi 0, %s32
    %s19 = sphi 0, %s28
    %s20 = sphi 0, %s17
    %s21 = sphi 0, %s18
    %s22 = sphi 0, %s19
    %s23 = sphi 0, %s20
    %s24 = sphi 0, %s21
    %s25 = sphi 0, %s22
    %s41 = sphi 0, %s43
    %s44 = sphi 0, %s41
    %s45 = sphi 0, %s44
    %s61 = sphi 0, %s45
    %s69 = sphi 0, %s71
    %s72 = sphi 0, %s69
    %s73 = sphi 0, %s72
    %s89 = sphi 0, %s73
    %s99 = sphi 0, %s101
    %s102 = sphi 0, %s99
    %s103 = sphi 0, %s102
    %s119 = sphi 0, %s103
    %s127 = sphi 0, %s129
    %s130 = sphi 0, %s127
    %s131 = sphi 0, %s130
    %s147 = sphi 0, %s131
  $region4: #{chamfer_loss.1} parent=0 // loop_header_branch
    %13 = sbr.rel (%p11) target = $region8
  $region5: #{chamfer_loss.1} parent=0 // loop_body
    %s15 = ssub.s32 %s10, 1
    %s16 = ssub.s32 %s10, 2
    %s26 = sadd.s32 1, %s19
    %p27 = scmp.ge.s32.totalorder %s26, 1
    %s28 = scalar_select %p27, 0, %s26
    %s29 = sadd.s32 1, %s18
    %s30 = scalar_select %p27, %s29, %s18
    %p31 = scmp.ge.s32.totalorder %s30, 1
    %s32 = scalar_select %p31, 0, %s30
    %s33 = sadd.s32 1, %s17
    %s34 = scalar_select %p31, %s33, %s17
    %p35 = scmp.ge.s32.totalorder %s34, 2
    %s36 = scalar_select %p35, 0, %s34
    %s37 = ssub.s32 %s17, %s36
    %s38 = ssub.s32 %s18, %s32
    %s39 = sor.u32 %s37, %s38
    %p40 = scmp.eq.s32.totalorder %s39, 0
    %s42 = sadd.s32 %s41, 1
    %s43 = scalar_select %p40, %s41, %s42
    %p46 = pneg %p40
    %p47 = scmp.eq.s32.totalorder %s10, 1
    %p48 = por %p46, %p47
    %p49 = scmp.ne.s32.totalorder %s41, %s44
    %p50 = scmp.eq.s32.totalorder %s10, 0
    %p51 = por %p49, %p50
    %p52 = scmp.ne.s32.totalorder %s41, %s44
    %p53 = scmp.eq.s32.totalorder %s15, 1
    %p54 = por %p52, %p53
    %p55 = scmp.ne.s32.totalorder %s44, %s45
    %p56 = scmp.eq.s32.totalorder %s15, 0
    %p57 = por %p55, %p56
    %p58 = scmp.ne.s32.totalorder %s44, %s45
    %p59 = scmp.eq.s32.totalorder %s16, 1
    %p60 = por %p58, %p59
    %p62 = scmp.ne.s32.totalorder %s45, %s61
    %p63 = scmp.eq.s32.totalorder %s16, 0
    %p64 = por %p62, %p63
    %s65 = ssub.s32 %s17, %s36
    %s66 = ssub.s32 %s19, %s28
    %s67 = sor.u32 %s65, %s66
    %p68 = scmp.eq.s32.totalorder %s67, 0
    %s70 = sadd.s32 %s69, 1
    %s71 = scalar_select %p68, %s69, %s70
    %p74 = pneg %p68
    %p75 = scmp.eq.s32.totalorder %s10, 1
    %p76 = por %p74, %p75
    %p77 = scmp.ne.s32.totalorder %s69, %s72
    %p78 = scmp.eq.s32.totalorder %s10, 0
    %p79 = por %p77, %p78
    %p80 = scmp.ne.s32.totalorder %s69, %s72
    %p81 = scmp.eq.s32.totalorder %s15, 1
    %p82 = por %p80, %p81
    %p83 = scmp.ne.s32.totalorder %s72, %s73
    %p84 = scmp.eq.s32.totalorder %s15, 0
    %p85 = por %p83, %p84
    %p86 = scmp.ne.s32.totalorder %s72, %s73
    %p87 = scmp.eq.s32.totalorder %s16, 1
    %p88 = por %p86, %p87
    %p90 = scmp.ne.s32.totalorder %s73, %s89
    %p91 = scmp.eq.s32.totalorder %s16, 0
    %p92 = por %p90, %p91
    %s93 = ssub.s32 %s17, %s36
    %s94 = ssub.s32 %s18, %s32
    %s95 = sor.u32 %s93, %s94
    %s96 = ssub.s32 %s19, %s28
    %s97 = sor.u32 %s95, %s96
    %p98 = scmp.eq.s32.totalorder %s97, 0
    %s100 = sadd.s32 %s99, 1
    %s101 = scalar_select %p98, %s99, %s100
    %p104 = pneg %p98
    %p105 = scmp.eq.s32.totalorder %s10, 1
    %p106 = por %p104, %p105
    %p107 = scmp.ne.s32.totalorder %s99, %s102
    %p108 = scmp.eq.s32.totalorder %s10, 0
    %p109 = por %p107, %p108
    %p110 = scmp.ne.s32.totalorder %s99, %s102
    %p111 = scmp.eq.s32.totalorder %s15, 1
    %p112 = por %p110, %p111
    %p113 = scmp.ne.s32.totalorder %s102, %s103
    %p114 = scmp.eq.s32.totalorder %s15, 0
    %p115 = por %p113, %p114
    %p116 = scmp.ne.s32.totalorder %s102, %s103
    %p117 = scmp.eq.s32.totalorder %s16, 1
    %p118 = por %p116, %p117
    %p120 = scmp.ne.s32.totalorder %s103, %s119
    %p121 = scmp.eq.s32.totalorder %s16, 0
    %p122 = por %p120, %p121
    %s123 = ssub.s32 %s17, %s36
    %s124 = ssub.s32 %s18, %s32
    %s125 = sor.u32 %s123, %s124
    %p126 = scmp.eq.s32.totalorder %s125, 0
    %s128 = sadd.s32 %s127, 1
    %s129 = scalar_select %p126, %s127, %s128
    %p132 = pneg %p126
    %p133 = scmp.eq.s32.totalorder %s10, 1
    %p134 = por %p132, %p133
    %p135 = scmp.ne.s32.totalorder %s127, %s130
    %p136 = scmp.eq.s32.totalorder %s10, 0
    %p137 = por %p135, %p136
    %p138 = scmp.ne.s32.totalorder %s127, %s130
    %p139 = scmp.eq.s32.totalorder %s15, 1
    %p140 = por %p138, %p139
    %p141 = scmp.ne.s32.totalorder %s130, %s131
    %p142 = scmp.eq.s32.totalorder %s15, 0
    %p143 = por %p141, %p142
    %p144 = scmp.ne.s32.totalorder %s130, %s131
    %p145 = scmp.eq.s32.totalorder %s16, 1
    %p146 = por %p144, %p145
    %p148 = scmp.ne.s32.totalorder %s131, %s147
    %p149 = scmp.eq.s32.totalorder %s16, 0
    %p150 = por %p148, %p149
    %p151 = scmp.le.s32.totalorder 1, %s10
    %p152 = scmp.lt.s32.totalorder %s10, 3
    %p153 = pnand %p151, %p152
    %p154 = pneg %p153
    // Predicated region
    $region9: #{chamfer_loss.1} parent=5 // pred_check
      _
    $region10: #{chamfer_loss.1} parent=5 // pred_check_branch
      %156 = sbr.rel (%p153) target = $region12
    $region11: #{chamfer_loss.1} parent=5 // pred_region
      %s157 = ssub.s32 %s10, 1
    $region12: #{chamfer_loss.1} parent=5 // pred_fallthru
      _
    %p158 = scmp.lt.s32.totalorder %s10, 2
    // Predicated region
    $region13: #{chamfer_loss.1} parent=5 // pred_check
      %p159 = pneg %p158
    $region14: #{chamfer_loss.1} parent=5 // pred_check_branch
      %161 = sbr.rel (%p159) target = $region16
    $region15: #{chamfer_loss.1} parent=5 // pred_region
      // Predicated region
      $region17: #{chamfer_loss.1} parent=15 // pred_check
        %p162 = pneg %p51
      $region18: #{chamfer_loss.1} parent=15 // pred_check_branch
        %164 = sbr.rel (%p162) target = $region20
      $region19: #{chamfer_loss.1} parent=15 // pred_region
        %s165 = smul.u32 16, %s18
        %p166 = scmp.lt.s32.totalorder %s17, 1
        %s167 = scalar_select %p166, %s17, 1
        %p168 = scmp.lt.s32.totalorder %s165, 15
        %s169 = scalar_select %p168, %s165, 15
        %s170 = smul.addr %s167, 16
        %s171 = sadd.s32 %s169, %s170
        %s172 = smul.addr %s171, 4
        %s173 = scalar_lea.vmem %s0, %s172
        %s174 = smul.u32 16, %s18
      $region20: #{chamfer_loss.1} parent=15 // pred_fallthru
        _
      // Predicated region
      $region21: #{chamfer_loss.1} parent=15 // pred_check
        %p175 = pneg %p79
      $region22: #{chamfer_loss.1} parent=15 // pred_check_branch
        %177 = sbr.rel (%p175) target = $region24
      $region23: #{chamfer_loss.1} parent=15 // pred_region
        %p178 = scmp.lt.s32.totalorder %s17, 1
        %s179 = scalar_select %p178, %s17, 1
        %p180 = scmp.lt.s32.totalorder %s19, 0
        %s181 = scalar_select %p180, %s19, 0
        %s182 = smul.addr %s179, 2
        %s183 = sadd.s32 %s181, %s182
        %s184 = smul.addr %s183, 4
        %s185 = scalar_lea.vmem %s1, %s184
      $region24: #{chamfer_loss.1} parent=15 // pred_fallthru
        _
    $region16: #{chamfer_loss.1} parent=5 // pred_fallthru
      _
    %p186 = scmp.le.s32.totalorder 1, %s10
    %p187 = scmp.lt.s32.totalorder %s10, 3
    %p188 = pnand %p186, %p187
    %p189 = pneg %p188
    // Predicated region
    $region25: #{chamfer_loss.1} parent=5 // pred_check
      _
    $region26: #{chamfer_loss.1} parent=5 // pred_check_branch
      %191 = sbr.rel (%p188) target = $region28
    $region27: #{chamfer_loss.1} parent=5 // pred_region
      %s192 = ssub.s32 %s10, 1
      %s193 = smul.u32 16, %s21
      %p194 = scmp.lt.s32.totalorder %s20, 1
      %s195 = scalar_select %p194, %s20, 1
      %p196 = scmp.lt.s32.totalorder %s193, 15
      %s197 = scalar_select %p196, %s193, 15
      %s198 = smul.addr %s195, 16
      %s199 = sadd.s32 %s197, %s198
      %s200 = smul.addr %s199, 4
      %s201 = scalar_lea.vmem %s0, %s200
      %p202 = pneg %p57
      %p203 = pneg %p54
      %p204 = scmp.lt.s32.totalorder %s20, 1
      %s205 = scalar_select %p204, %s20, 1
      %p206 = scmp.lt.s32.totalorder %s22, 0
      %s207 = scalar_select %p206, %s22, 0
      %s208 = smul.addr %s205, 2
      %s209 = sadd.s32 %s207, %s208
      %s210 = smul.addr %s209, 4
      %s211 = scalar_lea.vmem %s1, %s210
      %p212 = pneg %p85
      %p213 = pneg %p82
      %p214 = pneg %p115
      %p215 = pneg %p112
      %p216 = scmp.lt.s32.totalorder %s20, 1
      %s217 = scalar_select %p216, %s20, 1
      %p218 = scmp.lt.s32.totalorder %s21, 0
      %s219 = scalar_select %p218, %s21, 0
      %p220 = scmp.lt.s32.totalorder %s22, 0
      %s221 = scalar_select %p220, %s22, 0
      %s222 = sadd.s32 %s221, %s219
      %s223 = sadd.s32 %s222, %s217
      %s224 = scalar_lea.vmem %s2, %s223
      %p225 = pneg %p143
      %p226 = pneg %p140
      %s227 = smul.u32 16, %s21
      %p228 = scmp.lt.s32.totalorder %s20, 1
      %s229 = scalar_select %p228, %s20, 1
      %p230 = scmp.lt.s32.totalorder %s227, 15
      %s231 = scalar_select %p230, %s227, 15
      %s232 = smul.addr %s229, 16
      %s233 = sadd.s32 %s231, %s232
      %s234 = smul.addr %s233, 8
      %s235 = scalar_lea.vmem %s3, %s234
      %s236 = smul.u32 16, %s21
      %p237 = scmp.lt.s32.totalorder %s20, 1
      %s238 = scalar_select %p237, %s20, 1
      %p239 = scmp.lt.s32.totalorder %s236, 15
      %s240 = scalar_select %p239, %s236, 15
      %s241 = smul.addr %s238, 16
      %s242 = sadd.s32 %s240, %s241
      %s243 = smul.addr %s242, 4
      %s244 = scalar_lea.vmem %s0, %s243
      %s245 = smul.u32 16, %s21
      %p246 = scmp.lt.s32.totalorder %s20, 1
      %s247 = scalar_select %p246, %s20, 1
      %p248 = scmp.lt.s32.totalorder %s22, 0
      %s249 = scalar_select %p248, %s22, 0
      %s250 = smul.addr %s247, 2
      %s251 = sadd.s32 %s249, %s250
      %s252 = smul.addr %s251, 4
      %s253 = scalar_lea.vmem %s1, %s252
      %p254 = scmp.lt.s32.totalorder %s20, 1
      %s255 = scalar_select %p254, %s20, 1
      %p256 = scmp.lt.s32.totalorder %s21, 0
      %s257 = scalar_select %p256, %s21, 0
      %p258 = scmp.lt.s32.totalorder %s22, 0
      %s259 = scalar_select %p258, %s22, 0
      %s260 = sadd.s32 %s259, %s257
      %s261 = sadd.s32 %s260, %s255
      %s262 = scalar_lea.vmem %s2, %s261
      %s263 = smul.u32 16, %s21
      %p264 = scmp.lt.s32.totalorder %s20, 1
      %s265 = scalar_select %p264, %s20, 1
      %p266 = scmp.lt.s32.totalorder %s263, 15
      %s267 = scalar_select %p266, %s263, 15
      %s268 = smul.addr %s265, 16
      %s269 = sadd.s32 %s267, %s268
      %s270 = smul.addr %s269, 8
      %s271 = scalar_lea.vmem %s3, %s270
      %s272 = smul.u32 16, %s21
      %p274 = scmp.eq.s32.totalorder %s22, 0
      // Predicated region
      $region29: #{chamfer_loss.1} parent=27 // pred_check
        %p275 = pneg %p274
      $region30: #{chamfer_loss.1} parent=27 // pred_check_branch
        %277 = sbr.rel (%p275) target = $region32
      $region31: #{chamfer_loss.1} parent=27 // pred_region
        %278 = vst [vmem:[#allocation2] sm:$0xff] inf
        %279 = vst [vmem:[#allocation2 + $0x8] sm:$0xff] inf
        %280 = vst [vmem:[#allocation2 + $0x10] sm:$0xff] inf
        %281 = vst [vmem:[#allocation2 + $0x18] sm:$0xff] inf
        %282 = vst [vmem:[#allocation2 + $0x20] sm:$0xff] inf
        %283 = vst [vmem:[#allocation2 + $0x28] sm:$0xff] inf
        %284 = vst [vmem:[#allocation2 + $0x30] sm:$0xff] inf
        %285 = vst [vmem:[#allocation2 + $0x38] sm:$0xff] inf
        %286 = vst [vmem:[#allocation2 + $0x40] sm:$0xff] inf
        %287 = vst [vmem:[#allocation2 + $0x48] sm:$0xff] inf
        %288 = vst [vmem:[#allocation2 + $0x50] sm:$0xff] inf
        %289 = vst [vmem:[#allocation2 + $0x58] sm:$0xff] inf
        %290 = vst [vmem:[#allocation2 + $0x60] sm:$0xff] inf
        %291 = vst [vmem:[#allocation2 + $0x68] sm:$0xff] inf
        %292 = vst [vmem:[#allocation2 + $0x70] sm:$0xff] inf
        %293 = vst [vmem:[#allocation2 + $0x78] sm:$0xff] inf
      $region32: #{chamfer_loss.1} parent=27 // pred_fallthru
        _
      %v294 = vld [vmem:[%s244] sm:$0xf]
      %v295 = vld [vmem:[%s244 + $0x4] sm:$0xf]
      %v296 = vld [vmem:[%s244 + $0x8] sm:$0xf]
      %v297 = vld [vmem:[%s244 + $0xc] sm:$0xf]
      %v298 = vld [vmem:[%s244 + $0x10] sm:$0xf]
      %v299 = vld [vmem:[%s244 + $0x14] sm:$0xf]
      %v300 = vld [vmem:[%s244 + $0x18] sm:$0xf]
      %v301 = vld [vmem:[%s244 + $0x1c] sm:$0xf]
      %v302 = vld [vmem:[%s244 + $0x20] sm:$0xf]
      %v303 = vld [vmem:[%s244 + $0x24] sm:$0xf]
      %v304 = vld [vmem:[%s244 + $0x28] sm:$0xf]
      %v305 = vld [vmem:[%s244 + $0x2c] sm:$0xf]
      %v306 = vld [vmem:[%s244 + $0x30] sm:$0xf]
      %v307 = vld [vmem:[%s244 + $0x34] sm:$0xf]
      %v308 = vld [vmem:[%s244 + $0x38] sm:$0xf]
      %v309 = vld [vmem:[%s244 + $0x3c] sm:$0xf]
      %v310 = vld [vmem:[#allocation2] sm:$0xff]
      %v311 = vld [vmem:[#allocation2 + $0x8] sm:$0xff]
      %v312 = vld [vmem:[#allocation2 + $0x10] sm:$0xff]
      %v313 = vld [vmem:[#allocation2 + $0x18] sm:$0xff]
      %v314 = vld [vmem:[#allocation2 + $0x20] sm:$0xff]
      %v315 = vld [vmem:[#allocation2 + $0x28] sm:$0xff]
      %v316 = vld [vmem:[#allocation2 + $0x30] sm:$0xff]
      %v317 = vld [vmem:[#allocation2 + $0x38] sm:$0xff]
      %v318 = vld [vmem:[#allocation2 + $0x40] sm:$0xff]
      %v319 = vld [vmem:[#allocation2 + $0x48] sm:$0xff]
      %v320 = vld [vmem:[#allocation2 + $0x50] sm:$0xff]
      %v321 = vld [vmem:[#allocation2 + $0x58] sm:$0xff]
      %v322 = vld [vmem:[#allocation2 + $0x60] sm:$0xff]
      %v323 = vld [vmem:[#allocation2 + $0x68] sm:$0xff]
      %v324 = vld [vmem:[#allocation2 + $0x70] sm:$0xff]
      %v325 = vld [vmem:[#allocation2 + $0x78] sm:$0xff]
      %v326 = vld [vmem:[%s253] sm:$0xf]
      %v327 = vld [vmem:[%s253 + $0x4] sm:$0xf]
      %v344 = vunpack.c.l.b16 %v294
      %v345 = vunpack.c.l.b16 %v295
      %v346 = vunpack.c.l.b16 %v296
      %v347 = vunpack.c.l.b16 %v297
      %v348 = vunpack.c.l.b16 %v298
      %v349 = vunpack.c.l.b16 %v299
      %v350 = vunpack.c.l.b16 %v300
      %v351 = vunpack.c.l.b16 %v301
      %v352 = vunpack.c.l.b16 %v302
      %v353 = vunpack.c.l.b16 %v303
      %v354 = vunpack.c.l.b16 %v304
      %v355 = vunpack.c.l.b16 %v305
      %v356 = vunpack.c.l.b16 %v306
      %v357 = vunpack.c.l.b16 %v307
      %v358 = vunpack.c.l.b16 %v308
      %v359 = vunpack.c.l.b16 %v309
      %v360 = vpack.c.b16 %v345, %v344
      %v361 = vpack.c.b16 %v347, %v346
      %v362 = vpack.c.b16 %v349, %v348
      %v363 = vpack.c.b16 %v351, %v350
      %v364 = vpack.c.b16 %v353, %v352
      %v365 = vpack.c.b16 %v355, %v354
      %v366 = vpack.c.b16 %v357, %v356
      %v367 = vpack.c.b16 %v359, %v358
      %v370 = vunpack.c.l.b16 %v326
      %v371 = vunpack.c.l.b16 %v327
      %v372 = vpack.c.b16 %v371, %v370
      %vm374 = vcmask 130048
      %v376 = vsel %vm374, %v360, 0
      %v379 = vsel %vm374, %v361, 0
      %v382 = vsel %vm374, %v362, 0
      %v385 = vsel %vm374, %v363, 0
      %v388 = vsel %vm374, %v364, 0
      %v391 = vsel %vm374, %v365, 0
      %v394 = vsel %vm374, %v366, 0
      %v397 = vsel %vm374, %v367, 0
      %399 = vmatprep.subr.bf16.mxu0 0
      %400 = vmatpush1.bf16.msra.mxu0 %v372
      %401 = vmatprep.subr.bf16.mxu0 0
      %402 = vmatpush1.bf16.msra.mxu0 0
      %403 = vmatprep.subr.bf16.mxu0 0
      %404 = vmatpush1.bf16.msra.mxu0 0
      %405 = vmatprep.subr.bf16.mxu0 0
      %406 = vmatpush1.bf16.msra.mxu0 0
      %407 = vmatprep.subr.bf16.mxu0 0
      %408 = vmatpush1.bf16.msra.mxu0 0
      %409 = vmatprep.subr.bf16.mxu0 0
      %410 = vmatpush1.bf16.msra.mxu0 0
      %411 = vmatprep.subr.bf16.mxu0 0
      %412 = vmatpush1.bf16.msra.mxu0 0
      %413 = vmatprep.subr.bf16.mxu0 0
      %414 = vmatpush1.bf16.msra.mxu0 0
      %415 = vmatprep.subr.bf16.mxu0 0
      %416 = vmatpush1.bf16.msra.mxu0 0
      %417 = vmatprep.subr.bf16.mxu0 0
      %418 = vmatpush1.bf16.msra.mxu0 0
      %419 = vmatprep.subr.bf16.mxu0 0
      %420 = vmatpush1.bf16.msra.mxu0 0
      %421 = vmatprep.subr.bf16.mxu0 0
      %422 = vmatpush1.bf16.msra.mxu0 0
      %423 = vmatprep.subr.bf16.mxu0 0
      %424 = vmatpush1.bf16.msra.mxu0 0
      %425 = vmatprep.subr.bf16.mxu0 0
      %426 = vmatpush1.bf16.msra.mxu0 0
      %427 = vmatprep.subr.bf16.mxu0 0
      %428 = vmatpush1.bf16.msra.mxu0 0
      %429 = vmatprep.subr.bf16.mxu0 0
      %430 = vmatpush1.bf16.msra.mxu0 0
      %431 = vmatprep.mubr.bf16.mxu0 0
      %432 = vmatmul.mubr.bf16.gmra.mrb[0].mxu0 %v376
      %v433 = vpop.f32.mrb[0].mxu0
      %v434 = vadd.f32 0.0, %v433
      %v435 = vpop.f32.mrb[0].mxu0
      %v436 = vpop.f32.mrb[0].mxu0
      %v437 = vadd.f32 0.0, %v436
      %v438 = vpop.f32.mrb[0].mxu0
      %439 = vmatprep.mubr.bf16.mxu0 0
      %440 = vmatmul.mubr.bf16.gmra.mrb[0].mxu0 %v379
      %v441 = vpop.f32.mrb[0].mxu0
      %v442 = vadd.f32 0.0, %v441
      %v443 = vpop.f32.mrb[0].mxu0
      %v444 = vpop.f32.mrb[0].mxu0
      %v445 = vadd.f32 0.0, %v444
      %v446 = vpop.f32.mrb[0].mxu0
      %447 = vmatprep.mubr.bf16.mxu0 0
      %448 = vmatmul.mubr.bf16.gmra.mrb[0].mxu0 %v382
      %v449 = vpop.f32.mrb[0].mxu0
      %v450 = vadd.f32 0.0, %v449
      %v451 = vpop.f32.mrb[0].mxu0
      %v452 = vpop.f32.mrb[0].mxu0
      %v453 = vadd.f32 0.0, %v452
      %v454 = vpop.f32.mrb[0].mxu0
      %455 = vmatprep.mubr.bf16.mxu0 0
      %456 = vmatmul.mubr.bf16.gmra.mrb[0].mxu0 %v385
      %v457 = vpop.f32.mrb[0].mxu0
      %v458 = vadd.f32 0.0, %v457
      %v459 = vpop.f32.mrb[0].mxu0
      %v460 = vpop.f32.mrb[0].mxu0
      %v461 = vadd.f32 0.0, %v460
      %v462 = vpop.f32.mrb[0].mxu0
      %463 = vmatprep.mubr.bf16.mxu0 0
      %464 = vmatmul.mubr.bf16.gmra.mrb[0].mxu0 %v388
      %v465 = vpop.f32.mrb[0].mxu0
      %v466 = vadd.f32 0.0, %v465
      %v467 = vpop.f32.mrb[0].mxu0
      %v468 = vpop.f32.mrb[0].mxu0
      %v469 = vadd.f32 0.0, %v468
      %v470 = vpop.f32.mrb[0].mxu0
      %471 = vmatprep.mubr.bf16.mxu0 0
      %472 = vmatmul.mubr.bf16.gmra.mrb[0].mxu0 %v391
      %v473 = vpop.f32.mrb[0].mxu0
      %v474 = vadd.f32 0.0, %v473
      %v475 = vpop.f32.mrb[0].mxu0
      %v476 = vpop.f32.mrb[0].mxu0
      %v477 = vadd.f32 0.0, %v476
      %v478 = vpop.f32.mrb[0].mxu0
      %479 = vmatprep.mubr.bf16.mxu0 0
      %480 = vmatmul.mubr.bf16.gmra.mrb[0].mxu0 %v394
      %v481 = vpop.f32.mrb[0].mxu0
      %v482 = vadd.f32 0.0, %v481
      %v483 = vpop.f32.mrb[0].mxu0
      %v484 = vpop.f32.mrb[0].mxu0
      %v485 = vadd.f32 0.0, %v484
      %v486 = vpop.f32.mrb[0].mxu0
      %487 = vmatprep.mubr.bf16.mxu0 0
      %488 = vmatmul.mubr.bf16.gmra.mrb[0].mxu0 %v397
      %v489 = vpop.f32.mrb[0].mxu0
      %v490 = vadd.f32 0.0, %v489
      %v491 = vpop.f32.mrb[0].mxu0
      %v492 = vpop.f32.mrb[0].mxu0
      %v493 = vadd.f32 0.0, %v492
      %v494 = vpop.f32.mrb[0].mxu0
      %495 = vdwg.mxu0
      %v496 = vmin.f32 %v434, %v450
      %v497 = vmin.f32 %v437, %v453
      %v498 = vmin.f32 %v442, %v458
      %v499 = vmin.f32 %v445, %v461
      %v500 = vmin.f32 %v496, %v466
      %v501 = vmin.f32 %v497, %v469
      %v502 = vmin.f32 %v498, %v474
      %v503 = vmin.f32 %v499, %v477
      %v504 = vmin.f32 %v500, %v482
      %v505 = vmin.f32 %v501, %v485
      %v506 = vmin.f32 %v502, %v490
      %v507 = vmin.f32 %v503, %v493
      %v508 = vmin.f32 %v504, %v505
      %v509 = vmin.f32 %v506, %v507
      %v510 = vmin.f32 %v508, %v509
      %v511 = vrot.slane %v510, 4
      %v512 = vmin.f32 %v510, %v511
      %v513 = vrot.slane %v512, 2
      %v514 = vmin.f32 %v512, %v513
      %v515 = vrot.slane %v514, 1
      %v516 = vmin.f32 %v514, %v515
      %v517 = vmin.f32 %v310, %v434
      %v518 = vmin.f32 %v311, %v437
      %v519 = vmin.f32 %v312, %v442
      %v520 = vmin.f32 %v313, %v445
      %v521 = vmin.f32 %v314, %v450
      %v522 = vmin.f32 %v315, %v453
      %v523 = vmin.f32 %v316, %v458
      %v524 = vmin.f32 %v317, %v461
      %v525 = vmin.f32 %v318, %v466
      %v526 = vmin.f32 %v319, %v469
      %v527 = vmin.f32 %v320, %v474
      %v528 = vmin.f32 %v321, %v477
      %v529 = vmin.f32 %v322, %v482
      %v530 = vmin.f32 %v323, %v485
      %v531 = vmin.f32 %v324, %v490
      %v532 = vmin.f32 %v325, %v493
      %533 = vst [vmem:[#allocation2] sm:$0xff] %v517
      %534 = vst [vmem:[#allocation2 + $0x8] sm:$0xff] %v518
      %535 = vst [vmem:[#allocation2 + $0x10] sm:$0xff] %v519
      %536 = vst [vmem:[#allocation2 + $0x18] sm:$0xff] %v520
      %537 = vst [vmem:[#allocation2 + $0x20] sm:$0xff] %v521
      %538 = vst [vmem:[#allocation2 + $0x28] sm:$0xff] %v522
      %539 = vst [vmem:[#allocation2 + $0x30] sm:$0xff] %v523
      %540 = vst [vmem:[#allocation2 + $0x38] sm:$0xff] %v524
      %541 = vst [vmem:[#allocation2 + $0x40] sm:$0xff] %v525
      %542 = vst [vmem:[#allocation2 + $0x48] sm:$0xff] %v526
      %543 = vst [vmem:[#allocation2 + $0x50] sm:$0xff] %v527
      %544 = vst [vmem:[#allocation2 + $0x58] sm:$0xff] %v528
      %545 = vst [vmem:[#allocation2 + $0x60] sm:$0xff] %v529
      %546 = vst [vmem:[#allocation2 + $0x68] sm:$0xff] %v530
      %547 = vst [vmem:[#allocation2 + $0x70] sm:$0xff] %v531
      %548 = vst [vmem:[#allocation2 + $0x78] sm:$0xff] %v532
      %549 = vst [vmem:[%s262] sm:$0x1] %v516
      // Predicated region
      $region33: #{chamfer_loss.1} parent=27 // pred_check
        %p550 = pneg %p274
      $region34: #{chamfer_loss.1} parent=27 // pred_check_branch
        %552 = sbr.rel (%p550) target = $region36
      $region35: #{chamfer_loss.1} parent=27 // pred_region
        %v553 = vld [vmem:[#allocation2] sm:$0xff]
        %v554 = vld [vmem:[#allocation2 + $0x8] sm:$0xff]
        %v555 = vld [vmem:[#allocation2 + $0x10] sm:$0xff]
        %v556 = vld [vmem:[#allocation2 + $0x18] sm:$0xff]
        %v557 = vld [vmem:[#allocation2 + $0x20] sm:$0xff]
        %v558 = vld [vmem:[#allocation2 + $0x28] sm:$0xff]
        %v559 = vld [vmem:[#allocation2 + $0x30] sm:$0xff]
        %v560 = vld [vmem:[#allocation2 + $0x38] sm:$0xff]
        %v561 = vld [vmem:[#allocation2 + $0x40] sm:$0xff]
        %v562 = vld [vmem:[#allocation2 + $0x48] sm:$0xff]
        %v563 = vld [vmem:[#allocation2 + $0x50] sm:$0xff]
        %v564 = vld [vmem:[#allocation2 + $0x58] sm:$0xff]
        %v565 = vld [vmem:[#allocation2 + $0x60] sm:$0xff]
        %v566 = vld [vmem:[#allocation2 + $0x68] sm:$0xff]
        %v567 = vld [vmem:[#allocation2 + $0x70] sm:$0xff]
        %v568 = vld [vmem:[#allocation2 + $0x78] sm:$0xff]
        %569 = vmin.xlane.f32.xlu0 %v553
        %v570 = vpop.xlane.xlu0 %569
        %571 = vmin.xlane.f32.xlu0 %v554
        %v572 = vpop.xlane.xlu0 %571
        %573 = vmin.xlane.f32.xlu0 %v555
        %v574 = vpop.xlane.xlu0 %573
        %575 = vmin.xlane.f32.xlu0 %v556
        %v576 = vpop.xlane.xlu0 %575
        %577 = vmin.xlane.f32.xlu0 %v557
        %v578 = vpop.xlane.xlu0 %577
        %579 = vmin.xlane.f32.xlu0 %v558
        %v580 = vpop.xlane.xlu0 %579
        %581 = vmin.xlane.f32.xlu0 %v559
        %v582 = vpop.xlane.xlu0 %581
        %583 = vmin.xlane.f32.xlu0 %v560
        %v584 = vpop.xlane.xlu0 %583
        %585 = vmin.xlane.f32.xlu0 %v561
        %v586 = vpop.xlane.xlu0 %585
        %587 = vmin.xlane.f32.xlu0 %v562
        %v588 = vpop.xlane.xlu0 %587
        %589 = vmin.xlane.f32.xlu0 %v563
        %v590 = vpop.xlane.xlu0 %589
        %591 = vmin.xlane.f32.xlu0 %v564
        %v592 = vpop.xlane.xlu0 %591
        %593 = vmin.xlane.f32.xlu0 %v565
        %v594 = vpop.xlane.xlu0 %593
        %595 = vmin.xlane.f32.xlu0 %v566
        %v596 = vpop.xlane.xlu0 %595
        %597 = vmin.xlane.f32.xlu0 %v567
        %v598 = vpop.xlane.xlu0 %597
        %599 = vmin.xlane.f32.xlu0 %v568
        %v600 = vpop.xlane.xlu0 %599
        %vm601 = vcmask 7168
        %602 = vst.msk [vmem:[%s271] sm:$0xff] %vm601, %v570
        %603 = vst.msk [vmem:[%s271 + $0x8] sm:$0xff] %vm601, %v572
        %604 = vst.msk [vmem:[%s271 + $0x10] sm:$0xff] %vm601, %v574
        %605 = vst.msk [vmem:[%s271 + $0x18] sm:$0xff] %vm601, %v576
        %606 = vst.msk [vmem:[%s271 + $0x20] sm:$0xff] %vm601, %v578
        %607 = vst.msk [vmem:[%s271 + $0x28] sm:$0xff] %vm601, %v580
        %608 = vst.msk [vmem:[%s271 + $0x30] sm:$0xff] %vm601, %v582
        %609 = vst.msk [vmem:[%s271 + $0x38] sm:$0xff] %vm601, %v584
        %610 = vst.msk [vmem:[%s271 + $0x40] sm:$0xff] %vm601, %v586
        %611 = vst.msk [vmem:[%s271 + $0x48] sm:$0xff] %vm601, %v588
        %612 = vst.msk [vmem:[%s271 + $0x50] sm:$0xff] %vm601, %v590
        %613 = vst.msk [vmem:[%s271 + $0x58] sm:$0xff] %vm601, %v592
        %614 = vst.msk [vmem:[%s271 + $0x60] sm:$0xff] %vm601, %v594
        %615 = vst.msk [vmem:[%s271 + $0x68] sm:$0xff] %vm601, %v596
        %616 = vst.msk [vmem:[%s271 + $0x70] sm:$0xff] %vm601, %v598
        %617 = vst.msk [vmem:[%s271 + $0x78] sm:$0xff] %vm601, %v600
      $region36: #{chamfer_loss.1} parent=27 // pred_fallthru
        _
      %p618 = scmp.lt.s32.totalorder %s20, 1
      %s619 = scalar_select %p618, %s20, 1
      %p620 = scmp.lt.s32.totalorder %s21, 0
      %s621 = scalar_select %p620, %s21, 0
      %p622 = scmp.lt.s32.totalorder %s22, 0
      %s623 = scalar_select %p622, %s22, 0
      %s624 = sadd.s32 %s623, %s621
      %s625 = sadd.s32 %s624, %s619
      %s626 = scalar_lea.vmem %s2, %s625
      %s627 = smul.u32 16, %s21
      %p628 = scmp.lt.s32.totalorder %s20, 1
      %s629 = scalar_select %p628, %s20, 1
      %p630 = scmp.lt.s32.totalorder %s627, 15
      %s631 = scalar_select %p630, %s627, 15
      %s632 = smul.addr %s629, 16
      %s633 = sadd.s32 %s631, %s632
      %s634 = smul.addr %s633, 8
      %s635 = scalar_lea.vmem %s3, %s634
      // Predicated region
      $region37: #{chamfer_loss.1} parent=27 // pred_check
        %p636 = pneg %p112
      $region38: #{chamfer_loss.1} parent=27 // pred_check_branch
        %638 = sbr.rel (%p636) target = $region40
      $region39: #{chamfer_loss.1} parent=27 // pred_region
        _
      $region40: #{chamfer_loss.1} parent=27 // pred_fallthru
        _
      // Predicated region
      $region41: #{chamfer_loss.1} parent=27 // pred_check
        %p639 = pneg %p140
      $region42: #{chamfer_loss.1} parent=27 // pred_check_branch
        %641 = sbr.rel (%p639) target = $region44
      $region43: #{chamfer_loss.1} parent=27 // pred_region
        %s642 = smul.u32 16, %s21
      $region44: #{chamfer_loss.1} parent=27 // pred_fallthru
        _
    $region28: #{chamfer_loss.1} parent=5 // pred_fallthru
      _
    %p643 = scmp.le.s32.totalorder 2, %s10
    // Predicated region
    $region45: #{chamfer_loss.1} parent=5 // pred_check
      %p644 = pneg %p643
    $region46: #{chamfer_loss.1} parent=5 // pred_check_branch
      %646 = sbr.rel (%p644) target = $region48
    $region47: #{chamfer_loss.1} parent=5 // pred_region
      %s647 = ssub.s32 %s10, 2
      // Predicated region
      $region49: #{chamfer_loss.1} parent=47 // pred_check
        %p648 = pneg %p118
      $region50: #{chamfer_loss.1} parent=47 // pred_check_branch
        %650 = sbr.rel (%p648) target = $region52
      $region51: #{chamfer_loss.1} parent=47 // pred_region
        %p651 = scmp.lt.s32.totalorder %s23, 1
        %s652 = scalar_select %p651, %s23, 1
        %p653 = scmp.lt.s32.totalorder %s24, 0
        %s654 = scalar_select %p653, %s24, 0
        %p655 = scmp.lt.s32.totalorder %s25, 0
        %s656 = scalar_select %p655, %s25, 0
        %s657 = sadd.s32 %s656, %s654
        %s658 = sadd.s32 %s657, %s652
        %s659 = scalar_lea.vmem %s2, %s658
      $region52: #{chamfer_loss.1} parent=47 // pred_fallthru
        _
      // Predicated region
      $region53: #{chamfer_loss.1} parent=47 // pred_check
        %p660 = pneg %p146
      $region54: #{chamfer_loss.1} parent=47 // pred_check_branch
        %662 = sbr.rel (%p660) target = $region56
      $region55: #{chamfer_loss.1} parent=47 // pred_region
        %s663 = smul.u32 16, %s24
        %p664 = scmp.lt.s32.totalorder %s23, 1
        %s665 = scalar_select %p664, %s23, 1
        %p666 = scmp.lt.s32.totalorder %s663, 15
        %s667 = scalar_select %p666, %s663, 15
        %s668 = smul.addr %s665, 16
        %s669 = sadd.s32 %s667, %s668
        %s670 = smul.addr %s669, 8
        %s671 = scalar_lea.vmem %s3, %s670
      $region56: #{chamfer_loss.1} parent=47 // pred_fallthru
        _
    $region48: #{chamfer_loss.1} parent=5 // pred_fallthru
      _
  $region6: #{chamfer_loss.1} parent=0 // loop_footer
    %s14 = sadd.s32 1, %s10
  $region7: #{chamfer_loss.1} parent=0 // loop_footer_branch
    %9 = sbr.rel target = $region3
  $region8: #{chamfer_loss.1} parent=0 // loop_exit
    _

</llo_original>
